<compile_context>
chip_gen: v5e
topology: v5e:2x2
jax: 0.10.0
libtpu: 0.0.40
codegen_flags: <defaults>
</compile_context>

<pallas_src>
import functools

import jax
import jax.numpy as jnp
from jax.experimental import pallas as pl
from jax.experimental.pallas import tpu as pltpu


def _packed_linear_kernel(x_ref, m_ref, b_ref, o_ref):
    # x_ref: (TM, 128) packed NDVI rows (G = 128 // S logical rows per row)
    # m_ref: (128, G)  block-diagonal expanded weight, kron(I_G, w)
    # b_ref: (1, 1)    bias scalar in SMEM
    # o_ref: (TM, G)   one output per logical row
    acc = jnp.dot(x_ref[...], m_ref[...], preferred_element_type=jnp.float32)
    o_ref[...] = (acc + b_ref[0, 0]).astype(o_ref.dtype)


def _cdiv(a, b):
    return (a + b - 1) // b


def _round_up(a, b):
    return _cdiv(a, b) * b


@functools.partial(jax.jit, static_argnames=("sequence_length",))
def linear_ndvi_forward(ndvi, years, seasons, weight, bias, *, sequence_length):
    del years, seasons  # unused, matching the PyTorch forward
    s = sequence_length
    if 128 % s != 0:
        # TODO(synk): lane repack assumes S divides 128 (true for the intended
        # S=8); other sequence lengths would need an LCM-based packing.
        raise NotImplementedError("sequence_length must divide 128")

    g = 128 // s                      # logical rows packed per 128-lane row
    x_flat = ndvi.reshape(-1)         # free (row-major, like .view)
    n = x_flat.shape[0] // s          # number of logical rows
    r = _cdiv(n, g)                   # packed rows

    if n % g == 0:
        x_packed = x_flat.reshape(r, 128)     # pure reshape, no HBM copy
    else:
        # Ragged tail (< 128 elements): zero-pad so the last packed row is
        # fully defined.  Only this branch materializes a copy of the input.
        x_packed = jnp.pad(x_flat, (0, r * 128 - n * s)).reshape(r, 128)

    # Expanded weight: M[gg * S + ss, gg] = w[ss].  x_packed @ M computes the
    # per-group dot products of all G logical rows of a packed row at once.
    w_col = weight.reshape(s, 1).astype(x_packed.dtype)
    m = jnp.kron(jnp.eye(g, dtype=x_packed.dtype), w_col)   # (128, G)
    b2d = bias.reshape(1, 1).astype(jnp.float32)

    # Row tile: as large as useful (1 MiB blocks at tm=2048), but split into at
    # least two grid steps when possible so v7x's two TensorCores both get work.
    tm = min(2048, max(8, _round_up(_cdiv(r, 2), 8)))
    grid = (_cdiv(r, tm),)

    out = pl.pallas_call(
        _packed_linear_kernel,
        out_shape=jax.ShapeDtypeStruct((r, g), ndvi.dtype),
        grid_spec=pltpu.PrefetchScalarGridSpec(
            num_scalar_prefetch=0,
            grid=grid,
            in_specs=[
                pl.BlockSpec((tm, 128), lambda i: (i, 0)),           # packed NDVI
                pl.BlockSpec((128, g), lambda i: (0, 0)),            # resident weight
                pl.BlockSpec(memory_space=pltpu.MemorySpace.SMEM),   # bias scalar
            ],
            out_specs=pl.BlockSpec((tm, g), lambda i: (i, 0)),
        ),
        compiler_params=pltpu.CompilerParams(
            dimension_semantics=("parallel",)),
    )(x_packed, m, b2d)

    # Row-major [R, G] flattens back to logical row order; drop the tail pad.
    return out.reshape(-1)[:n]


if __name__ == "__main__":
    sequence_length = 8

    key = jax.random.PRNGKey(0)
    k_data, k_w, k_b = jax.random.split(key, 3)

    # nn.Linear(S, 1): weight (1, S), bias (1,), init U(-1/sqrt(S), 1/sqrt(S))
    bound = 1.0 / (sequence_length ** 0.5)
    weight = jax.random.uniform(k_w, (1, sequence_length), jnp.float32, -bound, bound)
    bias = jax.random.uniform(k_b, (1,), jnp.float32, -bound, bound)

    def run_case(batch, spatial):
        kn, ky, ks = jax.random.split(jax.random.fold_in(k_data, spatial), 3)
        shape = (batch, spatial, sequence_length)
        ndvi = jax.random.normal(kn, shape, jnp.float32)
        years = jax.random.normal(ky, shape, jnp.float32)
        seasons = jax.random.normal(ks, shape, jnp.float32)

        out = linear_ndvi_forward(ndvi, years, seasons, weight, bias,
                                  sequence_length=sequence_length)
        out = jax.block_until_ready(out)

        ref = (ndvi.reshape(-1, sequence_length)
               @ weight.reshape(sequence_length) + bias[0])
        assert out.shape == (batch * spatial,)
        # Loose tolerance: the in-kernel dot uses default (reduced) MXU
        # precision, which is the perf-correct choice for this HBM-bound op.
        assert jnp.allclose(out, ref, atol=5e-2, rtol=5e-2), (out, ref)

    run_case(batch=2, spatial=16)   # N % 16 == 0: copy-free packed path
    run_case(batch=2, spatial=25)   # ragged tail: zero-padded last packed row

    print("KERNEL_OK")
</pallas_src>

<mosaic_0001>
module attributes {stable_mosaic.version = 11 : i64} {
  func.func @_packed_linear_kernel(%arg0: i32, %arg1: memref<8x128xf32, #tpu.memory_space<vmem>>, %arg2: memref<128x16xf32, #tpu.memory_space<vmem>>, %arg3: memref<1x1xf32, #tpu.memory_space<smem>>, %arg4: memref<8x16xf32, #tpu.memory_space<vmem>>) attributes {dimension_semantics = [#tpu.dimension_semantics<parallel>], iteration_bounds = array<i64: 1>, scalar_prefetch = 0 : i64, scratch_operands = 0 : i64, tpu.core_type = #tpu.core_type<tc>, window_params = [{transform_indices = @transform_0, window_bounds = array<i64: 8, 128>}, {pipeline_mode = #tpu.pipeline_mode<synchronous>, transform_indices = @transform_1, window_bounds = array<i64: 128, 16>}, {transform_indices = @transform_2, window_bounds = array<i64: 1, 1>}, {transform_indices = @transform_3, window_bounds = array<i64: 8, 16>}]} {
    %c0 = arith.constant 0 : index
    %c0_0 = arith.constant 0 : index
    %0 = vector.load %arg1[%c0, %c0_0] : memref<8x128xf32, #tpu.memory_space<vmem>>, vector<8x128xf32>
    %c0_1 = arith.constant 0 : index
    %c0_2 = arith.constant 0 : index
    %1 = vector.load %arg2[%c0_1, %c0_2] : memref<128x16xf32, #tpu.memory_space<vmem>>, vector<128x16xf32>
    %cst = arith.constant dense<0.000000e+00> : vector<8x16xf32>
    %2 = tpu.matmul %0, %1, %cst {dimension_numbers = #tpu.dot_dimension_numbers<[1], [0], [0], [1], [0, 0, 1, 1], [], []>} : vector<8x128xf32>, vector<128x16xf32>, vector<8x16xf32> -> vector<8x16xf32>
    %c0_3 = arith.constant 0 : index
    %c0_4 = arith.constant 0 : index
    %3 = memref.load %arg3[%c0_3, %c0_4] : memref<1x1xf32, #tpu.memory_space<smem>>
    %4 = vector.broadcast %3 : f32 to vector<8x16xf32>
    %5 = arith.addf %2, %4 : vector<8x16xf32>
    %c0_5 = arith.constant 0 : index
    %c0_6 = arith.constant 0 : index
    %6 = vector.load %arg4[%c0_5, %c0_6] : memref<8x16xf32, #tpu.memory_space<vmem>>, vector<8x16xf32>
    tpu.vector_store %arg4[%c0_5, %c0_6], %5 {strides = array<i32>} : memref<8x16xf32, #tpu.memory_space<vmem>>, vector<8x16xf32>,
    return
  }
  func.func @transform_0(%arg0: i32) -> (i32, i32) {
    %c0_i32 = arith.constant 0 : i32
    %c0_i32_0 = arith.constant 0 : i32
    return %arg0, %c0_i32 : i32, i32
  }
  func.func @transform_1(%arg0: i32) -> (i32, i32) {
    %c0_i32 = arith.constant 0 : i32
    %c0_i32_0 = arith.constant 0 : i32
    %c0_i32_1 = arith.constant 0 : i32
    return %c0_i32, %c0_i32_0 : i32, i32
  }
  func.func @transform_2(%arg0: i32) -> (i32, i32) {
    %c0_i32 = arith.constant 0 : i32
    %c0_i32_0 = arith.constant 0 : i32
    %c0_i32_1 = arith.constant 0 : i32
    return %c0_i32, %c0_i32_0 : i32, i32
  }
  func.func @transform_3(%arg0: i32) -> (i32, i32) {
    %c0_i32 = arith.constant 0 : i32
    %c0_i32_0 = arith.constant 0 : i32
    return %arg0, %c0_i32 : i32, i32
  }
}

</mosaic_0001>

<llo_original>
// kernel: linear_ndvi_forward.1
$region0: #{linear_ndvi_forward.1}
  #allocation0 [shape = 'u32[]', space=smem, size = 0x4, offset = 0x4, fixed_abs, tag = 'smem constant byte address 0x4 - core index']
  #allocation1 [shape = 'u32[72,128]{1,0:T(1,128)}', space=vmem, size = 0x9000, scoped, tag = 'internal scratch']
  #allocation2 [shape = 'f32[1,1]{1,0:T(1,128)S(6)}', space=smem, size = 0x200, scoped, tag = 'scoped memory for linear_ndvi_forward.1']
  %s0 = inlined_call_operand.vmem [shape: f32[2,128], index: 0, kind: input, shape index: {}]
  %s1 = inlined_call_operand.vmem [shape: f32[128,16], index: 1, kind: input, shape index: {}]
  %s2 = inlined_call_operand.<no memory space> [shape: f32[1,1], index: 2, kind: input, shape index: {}]
  %s3 = inlined_call_operand.vmem [shape: f32[2,16], index: 3, kind: output, shape index: {}]
  %s4 = sld [smem:[#allocation0]]
  $region52: #{linear_ndvi_forward.1} parent=0
    _
  %s6 = ssub.s32 1, %s4
  %s7 = scalar_select 0, %s6, %s4
  %8 = sst [smem:[#allocation2]] %s2
  $region1: #{linear_ndvi_forward.1} parent=0
    #allocation3 [shape = 'u8[4096]{0}', space=vmem, size = 0x1000, scoped, tag = 'output window, operand 0, single buffered']
    // Predicated region
    $region2: #{linear_ndvi_forward.1} parent=1 // pred_check
      _
    $region3: #{linear_ndvi_forward.1} parent=1 // pred_check_branch
      %10 = sbr.rel (0) target = $region5
    $region4: #{linear_ndvi_forward.1} parent=1 // pred_region
      _
    $region5: #{linear_ndvi_forward.1} parent=1 // pred_fallthru
      _
    // Predicated region
    $region6: #{linear_ndvi_forward.1} parent=1 // pred_check
      _
    $region7: #{linear_ndvi_forward.1} parent=1 // pred_check_branch
      %12 = sbr.rel (0) target = $region9
    $region8: #{linear_ndvi_forward.1} parent=1 // pred_region
      _
    $region9: #{linear_ndvi_forward.1} parent=1 // pred_fallthru
      _
    // Predicated region
    $region10: #{linear_ndvi_forward.1} parent=1 // pred_check
      _
    $region11: #{linear_ndvi_forward.1} parent=1 // pred_check_branch
      %14 = sbr.rel (0) target = $region13
    $region12: #{linear_ndvi_forward.1} parent=1 // pred_region
      _
    $region13: #{linear_ndvi_forward.1} parent=1 // pred_fallthru
      _
    %v15 = vld [vmem:[%s0] sm:$0xff]
    %v16 = vld [vmem:[%s1] sm:$0xff]
    %v17 = vld [vmem:[%s1 + $0x8] sm:$0xff]
    %v18 = vld [vmem:[%s1 + $0x10] sm:$0xff]
    %v19 = vld [vmem:[%s1 + $0x18] sm:$0xff]
    %v20 = vld [vmem:[%s1 + $0x20] sm:$0xff]
    %v21 = vld [vmem:[%s1 + $0x28] sm:$0xff]
    %v22 = vld [vmem:[%s1 + $0x30] sm:$0xff]
    %v23 = vld [vmem:[%s1 + $0x38] sm:$0xff]
    %v24 = vld [vmem:[%s1 + $0x40] sm:$0xff]
    %v25 = vld [vmem:[%s1 + $0x48] sm:$0xff]
    %v26 = vld [vmem:[%s1 + $0x50] sm:$0xff]
    %v27 = vld [vmem:[%s1 + $0x58] sm:$0xff]
    %v28 = vld [vmem:[%s1 + $0x60] sm:$0xff]
    %v29 = vld [vmem:[%s1 + $0x68] sm:$0xff]
    %v30 = vld [vmem:[%s1 + $0x70] sm:$0xff]
    %v31 = vld [vmem:[%s1 + $0x78] sm:$0xff]
    %s32 = sld [smem:[#allocation2]]
    %v33 = vstv %s32
    %34 = vmatpush.msra.mxu0 %v31
    %35 = vmatpush.msra.mxu0 %v30
    %36 = vmatpush.msra.mxu0 %v29
    %37 = vmatpush.msra.mxu0 %v28
    %38 = vmatpush.msra.mxu0 %v27
    %39 = vmatpush.msra.mxu0 %v26
    %40 = vmatpush.msra.mxu0 %v25
    %41 = vmatpush.msra.mxu0 %v24
    %42 = vmatpush.msra.mxu0 %v23
    %43 = vmatpush.msra.mxu0 %v22
    %44 = vmatpush.msra.mxu0 %v21
    %45 = vmatpush.msra.mxu0 %v20
    %46 = vmatpush.msra.mxu0 %v19
    %47 = vmatpush.msra.mxu0 %v18
    %48 = vmatpush.msra.mxu0 %v17
    %49 = vmatpush.msra.mxu0 %v16
    %50 = vmatmul.f32.gmra.mxu0 %v15
    %v51 = vpop.f32.mrf.mxu0
    %v52 = vadd.f32 %v33, %v51
    %53 = vdwg.mxu0
    %vm54 = vcmask 130048
    %55 = vst.msk [vmem:[#allocation3] sm:$0xff] %vm54, %v52
    // Predicated region
    $region14: #{linear_ndvi_forward.1} parent=1 // pred_check
      _
    $region15: #{linear_ndvi_forward.1} parent=1 // pred_check_branch
      %57 = sbr.rel (0) target = $region17
    $region16: #{linear_ndvi_forward.1} parent=1 // pred_region
      // Predicated region
      $region18: #{linear_ndvi_forward.1} parent=16 // pred_check
        _
      $region19: #{linear_ndvi_forward.1} parent=16 // pred_check_branch
        %59 = sbr.rel (0) target = $region21
      $region20: #{linear_ndvi_forward.1} parent=16 // pred_region
        // Predicated region
        $region22: #{linear_ndvi_forward.1} parent=20 // pred_check
          _
        $region23: #{linear_ndvi_forward.1} parent=20 // pred_check_branch
          %61 = sbr.rel target = $region25
        $region24: #{linear_ndvi_forward.1} parent=20 // pred_region
          // Predicated region
          $region37: #{linear_ndvi_forward.1} parent=24 // pred_check
            _
          $region38: #{linear_ndvi_forward.1} parent=24 // pred_check_branch
            %77 = sbr.rel (0) target = $region40
          $region39: #{linear_ndvi_forward.1} parent=24 // pred_region
            %s79 = ssub.s32 4, 1
            loop: start=0, step=1, limit=1
            $region41: #{linear_ndvi_forward.1} parent=39 // loop_pre_header
              _
            $region42: #{linear_ndvi_forward.1} parent=39 // loop_header
              %s81 = sphi 0, %s85
              %p82 = scmp.ge.s32.totalorder %s81, 1
              %s86 = sphi [#allocation3], [#allocation3]
              %s87 = sphi %s3, %s3
            $region43: #{linear_ndvi_forward.1} parent=39 // loop_header_branch
              %84 = sbr.rel (%p82) target = $region47
            $region44: #{linear_ndvi_forward.1} parent=39 // loop_body
              %v88 = vld [vmem:[%s86] sm:%s79]
              %89 = vst [vmem:[%s87] sm:%s79] %v88
            $region45: #{linear_ndvi_forward.1} parent=39 // loop_footer
              %s85 = sadd.s32 1, %s81
            $region46: #{linear_ndvi_forward.1} parent=39 // loop_footer_branch
              %80 = sbr.rel target = $region42
            $region47: #{linear_ndvi_forward.1} parent=39 // loop_exit
              _
          $region40: #{linear_ndvi_forward.1} parent=24 // pred_fallthru
            _
        $region25: #{linear_ndvi_forward.1} parent=20 // pred_fallthru
          _
        // Predicated region
        $region26: #{linear_ndvi_forward.1} parent=20 // pred_check
          _
        $region27: #{linear_ndvi_forward.1} parent=20 // pred_check_branch
          %63 = sbr.rel (0) target = $region29
        $region28: #{linear_ndvi_forward.1} parent=20 // pred_region
          %s65 = ssub.s32 4, 1
          loop: start=0, step=1, limit=1
          $region30: #{linear_ndvi_forward.1} parent=28 // loop_pre_header
            _
          $region31: #{linear_ndvi_forward.1} parent=28 // loop_header
            %s67 = sphi 0, %s71
            %p68 = scmp.ge.s32.totalorder %s67, 1
            %s72 = sphi [#allocation3], [#allocation3]
            %s73 = sphi %s3, %s3
          $region32: #{linear_ndvi_forward.1} parent=28 // loop_header_branch
            %70 = sbr.rel (%p68) target = $region36
          $region33: #{linear_ndvi_forward.1} parent=28 // loop_body
            %v74 = vld [vmem:[%s72] sm:%s65]
            %75 = vst [vmem:[%s73] sm:%s65] %v74
          $region34: #{linear_ndvi_forward.1} parent=28 // loop_footer
            %s71 = sadd.s32 1, %s67
          $region35: #{linear_ndvi_forward.1} parent=28 // loop_footer_branch
            %66 = sbr.rel target = $region31
          $region36: #{linear_ndvi_forward.1} parent=28 // loop_exit
            _
        $region29: #{linear_ndvi_forward.1} parent=20 // pred_fallthru
          _
      $region21: #{linear_ndvi_forward.1} parent=16 // pred_fallthru
        _
      %90 = vnop
    $region17: #{linear_ndvi_forward.1} parent=1 // pred_fallthru
      _
    // Predicated region
    $region48: #{linear_ndvi_forward.1} parent=1 // pred_check
      _
    $region49: #{linear_ndvi_forward.1} parent=1 // pred_check_branch
      %92 = sbr.rel (0) target = $region51
    $region50: #{linear_ndvi_forward.1} parent=1 // pred_region
      _
    $region51: #{linear_ndvi_forward.1} parent=1 // pred_fallthru
      _

</llo_original>
